<compile_context>
chip_gen: v5e
topology: v5e:2x2
jax: 0.10.0
libtpu: 0.0.40
codegen_flags: <defaults>
</compile_context>

<pallas_src>
import functools

import jax
import jax.numpy as jnp
from jax.experimental import pallas as pl
from jax.experimental.pallas import tpu as pltpu

VTH = 1.0
ALPHA_INIT_CONV = 0.9


def _conv_all(x, params, *, stride, padding, dilation,
              conv_dtype=jnp.bfloat16):
    """Hoisted x-dependent work: one conv over all (B*T) frames at once.

    bf16 inputs, f32 accumulation (native MXU path); bias added in f32.
    """
    B, T, Cin, H, W = x.shape
    w = params["conv_w"]
    Cout = w.shape[0]
    xf = x.reshape(B * T, Cin, H, W)
    conv = jax.lax.conv_general_dilated(
        xf.astype(conv_dtype), w.astype(conv_dtype),
        window_strides=(stride, stride),
        padding=[(padding, padding), (padding, padding)],
        rhs_dilation=(dilation, dilation),
        dimension_numbers=("NCHW", "OIHW", "NCHW"),
        preferred_element_type=jnp.float32)
    conv = conv + params["conv_b"].astype(jnp.float32)[None, :, None, None]
    _, _, Hout, Wout = conv.shape
    # Free contiguous reshape: (B, T, C, H*W) -- lane-dense last dim.
    return conv.reshape(B, T, Cout, Hout * Wout), (Hout, Wout)


def _choose_tiling(B, T, Cout, HWp, time_block, channel_block,
                   target_block_bytes=1 << 20):
    """VMEM-budget-aware (tb, cblk) selection + explicit vmem limit."""
    try:
        vmem_cap = int(pltpu.get_tpu_info().vmem_capacity_bytes)
    except Exception:  # pragma: no cover - fallback if query unsupported
        vmem_cap = 64 << 20                      # v7x-safe assumption
    budget = min(24 << 20, vmem_cap // 3)        # leave generous headroom

    def resident(tb, cb):
        return (2 * tb * cb * HWp * 4            # conv input, double-buffered
                + 2 * tb * cb * HWp * 2          # bf16 spikes, double-buffered
                + 2 * cb * HWp * 4               # mem + prev scratch (f32)
                + 2 * cb * 128 * 4)              # alpha (lane-padded), dbl-buf

    # Channel blocks must be the full C or a multiple of 8 (sublane tiling).
    c_divs = [d for d in range(1, Cout + 1)
              if Cout % d == 0 and (d == Cout or d % 8 == 0)]
    if channel_block is not None:
        cb = channel_block
        assert cb in c_divs, (channel_block, Cout)
    else:
        cb = Cout
        if B < 2:                                # give v7x 2nd TC / megacore
            smaller = [d for d in c_divs if d < cb]  # a parallel axis
            if smaller:
                cb = smaller[-1]
        while resident(1, cb) > budget:
            smaller = [d for d in c_divs if d < cb]
            if not smaller:
                break
            cb = smaller[-1]

    if time_block is not None:
        tb = time_block
        assert T % tb == 0, (T, tb)
    else:
        # TODO(synk): if T is prime and large, pad T (or block batch) instead
        # of falling back to tb=1 per-step overhead.
        t_divs = [d for d in range(1, T + 1) if T % d == 0]
        feasible = [d for d in t_divs if resident(d, cb) <= budget] or [1]
        tb = feasible[-1]                        # largest that fits VMEM
        for cand in feasible:                    # prefer smallest >= target
            if cand * cb * HWp * 4 >= target_block_bytes:
                tb = cand
                break

    vmem_limit = int(min(32 << 20, max(16 << 20, resident(tb, cb) + (4 << 20))))
    return tb, cb, vmem_limit


def _make_spiking_kernel(*, ternact, vth, tb):
    def kernel(conv_ref, alpha_ref, out_ref, mem_ref, prev_ref):
        # Start of a (batch, channel-block) time sequence: reset carried state.
        @pl.when(pl.program_id(2) == 0)
        def _():
            mem_ref[...] = jnp.zeros_like(mem_ref)
            prev_ref[...] = jnp.zeros_like(prev_ref)

        # alpha arrives as (cblk, 1); broadcast once per grid step (hoisted out
        # of the unrolled loop), never materialized at (C, HW) in HBM.
        alpha = jnp.broadcast_to(alpha_ref[...], mem_ref.shape)

        # Register-carried state across the tb unrolled timesteps: one scratch
        # load before the loop and one store after it (not per timestep).
        mem = mem_ref[...]
        prev = prev_ref[...]
        for i in range(tb):                      # tb small & static: unrolled
            mem = alpha * mem + conv_ref[0, i].astype(jnp.float32) - vth * prev
            if ternact:
                # == clamp(sign(mem+vth)+sign(mem-vth), -1, 1), incl. boundary
                prev = ((mem >= vth).astype(jnp.float32)
                        - (mem <= -vth).astype(jnp.float32))
            else:
                prev = (mem >= vth).astype(jnp.float32)
            out_ref[0, i] = prev.astype(out_ref.dtype)
        mem_ref[...] = mem
        prev_ref[...] = prev

    return kernel


def scnn_layer_pallas(x, params, *, ann, ternact, vth=VTH,
                      stride=1, padding=1, dilation=1,
                      time_block=None, channel_block=None,
                      out_dtype=jnp.bfloat16):
    B, T, _, _, _ = x.shape
    conv, (Hout, Wout) = _conv_all(x, params, stride=stride, padding=padding,
                                   dilation=dilation)
    Cout = conv.shape[2]
    HW = Hout * Wout

    if ann:
        # No recurrence: plain ReLU, fused by XLA into the conv epilogue.
        return jnp.maximum(conv, 0.0).reshape(B, T, Cout, Hout, Wout)

    # Lane-dense padding of HW to a multiple of 128. Padded lanes stay exactly
    # zero through the recurrence (0 < Vth), so the final crop is exact.
    HWp = ((HW + 127) // 128) * 128
    if HWp != HW:
        conv = jnp.pad(conv, ((0, 0), (0, 0), (0, 0), (0, HWp - HW)))

    tb, cblk, vmem_limit = _choose_tiling(B, T, Cout, HWp,
                                          time_block, channel_block)
    grid = (B, Cout // cblk, T // tb)

    blk = pl.BlockSpec((1, tb, cblk, HWp), lambda b, c, t: (b, t, c, 0))
    alpha = params["alpha"].astype(jnp.float32).reshape(Cout, 1)

    out = pl.pallas_call(
        _make_spiking_kernel(ternact=ternact, vth=vth, tb=tb),
        out_shape=jax.ShapeDtypeStruct((B, T, Cout, HWp), out_dtype),
        grid_spec=pltpu.PrefetchScalarGridSpec(
            num_scalar_prefetch=0, grid=grid,
            in_specs=[blk,
                      pl.BlockSpec((cblk, 1), lambda b, c, t: (c, 0))],
            out_specs=blk,
            scratch_shapes=[pltpu.VMEM((cblk, HWp), jnp.float32),   # mem
                            pltpu.VMEM((cblk, HWp), jnp.float32)]),  # prev
        compiler_params=pltpu.CompilerParams(
            dimension_semantics=("parallel", "parallel", "arbitrary"),
            vmem_limit_bytes=vmem_limit),
    )(conv, alpha)

    if HWp != HW:
        out = out[..., :HW]
    return out.reshape(B, T, Cout, Hout, Wout)


def scnn_layer_ref(x, params, *, ann, ternact, vth=VTH,
                   stride=1, padding=1, dilation=1):
    """Pure-JAX reference mirroring the PyTorch forward (shares _conv_all)."""
    B, T, _, _, _ = x.shape
    conv, (Hout, Wout) = _conv_all(x, params, stride=stride, padding=padding,
                                   dilation=dilation)
    Cout = conv.shape[2]
    conv = conv.reshape(B, T, Cout, Hout, Wout)
    if ann:
        return jnp.maximum(conv, 0.0)

    alpha = params["alpha"].astype(jnp.float32)

    def step(carry, conv_t):                 # conv_t: (B, Cout, H, W)
        mem, prev = carry
        mem = alpha[None, :, None, None] * mem + conv_t - vth * prev
        if ternact:
            out = jnp.clip(jnp.sign(mem + vth) + jnp.sign(mem - vth),
                           -1.0, 1.0)
        else:
            out = (mem >= vth).astype(jnp.float32)
        return (mem, out), out

    init = (jnp.zeros((B, Cout, Hout, Wout), jnp.float32),
            jnp.zeros((B, Cout, Hout, Wout), jnp.float32))
    _, ys = jax.lax.scan(step, init, jnp.transpose(conv, (1, 0, 2, 3, 4)))
    return jnp.transpose(ys, (1, 0, 2, 3, 4))


def init_params(key, in_channels, out_channels, kernel_size, *, ann):
    k1, k2 = jax.random.split(key)
    shape_w = (out_channels, in_channels, kernel_size, kernel_size)
    if ann:
        n = out_channels * kernel_size * kernel_size
        w = jax.random.normal(k1, shape_w, jnp.float32) * float(
            jnp.sqrt(2.0 / n))
        b = jnp.zeros((out_channels,), jnp.float32)
    else:
        k = float(jnp.sqrt(6.0 / (in_channels * kernel_size * kernel_size)))
        w = jax.random.uniform(k1, shape_w, jnp.float32, minval=-k, maxval=k)
        kb = float(jnp.sqrt(1.0 / (in_channels * kernel_size * kernel_size)))
        b = jax.random.uniform(k2, (out_channels,), jnp.float32,
                               minval=-kb, maxval=kb)
    p = {"conv_w": w, "conv_b": b}
    if not ann:
        p["alpha"] = jnp.full((out_channels,), ALPHA_INIT_CONV, jnp.float32)
    return p


if __name__ == "__main__":
    B, T, Cin, H, W = 2, 8, 4, 16, 16
    Cout, K = 8, 3
    key = jax.random.PRNGKey(0)
    kx, kp = jax.random.split(key)
    x = jax.random.normal(kx, (B, T, Cin, H, W), jnp.float32)

    configs = [
        dict(ann=False, ternact=False),   # binary spiking  (SpikeAct)
        dict(ann=False, ternact=True),    # ternary spiking (SpikeAct_signed)
        dict(ann=True, ternact=False),    # ANN mode (ReLU)
    ]

    for cfg in configs:
        params = init_params(kp, Cin, Cout, K, ann=cfg["ann"])
        run = jax.jit(functools.partial(scnn_layer_pallas, **cfg))
        out = jax.block_until_ready(run(x, params))
        ref = scnn_layer_ref(x, params, **cfg)
        assert out.shape == (B, T, Cout, H, W), out.shape
        out_f32 = out.astype(jnp.float32)
        err = float(jnp.max(jnp.abs(out_f32 - ref)))
        assert jnp.allclose(out_f32, ref, atol=1e-3, rtol=1e-3), (
            f"mismatch for config {cfg}: max err {err}")

    print("KERNEL_OK")
</pallas_src>

<mosaic_0001>
module attributes {stable_mosaic.version = 11 : i64} {
  func.func @kernel(%arg0: i32, %arg1: i32, %arg2: i32, %arg3: memref<1x8x8x256xf32, #tpu.memory_space<vmem>>, %arg4: memref<8x1xf32, #tpu.memory_space<vmem>>, %arg5: memref<1x8x8x256xbf16, #tpu.memory_space<vmem>>, %arg6: memref<8x256xf32, #tpu.memory_space<vmem>>, %arg7: memref<8x256xf32, #tpu.memory_space<vmem>>) attributes {dimension_semantics = [#tpu.dimension_semantics<parallel>, #tpu.dimension_semantics<parallel>, #tpu.dimension_semantics<arbitrary>], iteration_bounds = array<i64: 2, 1, 1>, scalar_prefetch = 0 : i64, scratch_operands = 2 : i64, tpu.core_type = #tpu.core_type<tc>, window_params = [{transform_indices = @transform_0, window_bounds = array<i64: 1, 8, 8, 256>}, {transform_indices = @transform_1, window_bounds = array<i64: 8, 1>}, {transform_indices = @transform_2, window_bounds = array<i64: 1, 8, 8, 256>}]} {
    %c0_i32 = arith.constant 0 : i32
    %0 = arith.cmpi eq, %arg2, %c0_i32 : i32
    %1 = arith.extui %0 : i1 to i32
    %c0_i32_0 = arith.constant 0 : i32
    %2 = arith.cmpi ne, %1, %c0_i32_0 : i32
    scf.if %2 {
      %cst_82 = arith.constant 0.000000e+00 : f32
      %130 = vector.broadcast %cst_82 : f32 to vector<8x256xf32>
      %c0_83 = arith.constant 0 : index
      %c0_84 = arith.constant 0 : index
      %131 = vector.load %arg6[%c0_83, %c0_84] : memref<8x256xf32, #tpu.memory_space<vmem>>, vector<8x256xf32>
      tpu.vector_store %arg6[%c0_83, %c0_84], %130 {strides = array<i32>} : memref<8x256xf32, #tpu.memory_space<vmem>>, vector<8x256xf32>,
      %cst_85 = arith.constant 0.000000e+00 : f32
      %132 = vector.broadcast %cst_85 : f32 to vector<8x256xf32>
      %c0_86 = arith.constant 0 : index
      %c0_87 = arith.constant 0 : index
      %133 = vector.load %arg7[%c0_86, %c0_87] : memref<8x256xf32, #tpu.memory_space<vmem>>, vector<8x256xf32>
      tpu.vector_store %arg7[%c0_86, %c0_87], %132 {strides = array<i32>} : memref<8x256xf32, #tpu.memory_space<vmem>>, vector<8x256xf32>,
    } else {
    }
    %c0 = arith.constant 0 : index
    %c0_1 = arith.constant 0 : index
    %3 = vector.load %arg4[%c0, %c0_1] : memref<8x1xf32, #tpu.memory_space<vmem>>, vector<8x1xf32>
    %4 = vector.shape_cast %3 : vector<8x1xf32> to vector<8x1xf32>
    %5 = vector.broadcast %4 : vector<8x1xf32> to vector<8x256xf32>
    %c0_2 = arith.constant 0 : index
    %c0_3 = arith.constant 0 : index
    %6 = vector.load %arg6[%c0_2, %c0_3] : memref<8x256xf32, #tpu.memory_space<vmem>>, vector<8x256xf32>
    %c0_4 = arith.constant 0 : index
    %c0_5 = arith.constant 0 : index
    %7 = vector.load %arg7[%c0_4, %c0_5] : memref<8x256xf32, #tpu.memory_space<vmem>>, vector<8x256xf32>
    %8 = arith.mulf %5, %6 : vector<8x256xf32>
    %c0_6 = arith.constant 0 : index
    %c0_7 = arith.constant 0 : index
    %c0_8 = arith.constant 0 : index
    %c0_9 = arith.constant 0 : index
    %9 = vector.load %arg3[%c0_6, %c0_7, %c0_8, %c0_9] : memref<1x8x8x256xf32, #tpu.memory_space<vmem>>, vector<1x1x8x256xf32>
    %10 = vector.shape_cast %9 : vector<1x1x8x256xf32> to vector<8x256xf32>
    %11 = arith.addf %8, %10 : vector<8x256xf32>
    %cst = arith.constant 1.000000e+00 : f32
    %12 = vector.broadcast %cst : f32 to vector<8x256xf32>
    %13 = arith.mulf %12, %7 : vector<8x256xf32>
    %14 = arith.subf %11, %13 : vector<8x256xf32>
    %cst_10 = arith.constant 1.000000e+00 : f32
    %15 = vector.broadcast %cst_10 : f32 to vector<8x256xf32>
    %16 = arith.cmpf oge, %14, %15 : vector<8x256xf32>
    %17 = arith.extui %16 : vector<8x256xi1> to vector<8x256xi32>
    %18 = arith.sitofp %17 : vector<8x256xi32> to vector<8x256xf32>
    %19 = arith.truncf %18 : vector<8x256xf32> to vector<8x256xbf16>
    %c0_11 = arith.constant 0 : index
    %c0_12 = arith.constant 0 : index
    %c0_13 = arith.constant 0 : index
    %c0_14 = arith.constant 0 : index
    %20 = vector.load %arg5[%c0_11, %c0_12, %c0_13, %c0_14] : memref<1x8x8x256xbf16, #tpu.memory_space<vmem>>, vector<1x1x8x256xbf16>
    %21 = vector.shape_cast %20 : vector<1x1x8x256xbf16> to vector<8x256xbf16>
    %22 = vector.shape_cast %19 : vector<8x256xbf16> to vector<1x1x8x256xbf16>
    tpu.vector_store %arg5[%c0_11, %c0_12, %c0_13, %c0_14], %22 {strides = array<i32>} : memref<1x8x8x256xbf16, #tpu.memory_space<vmem>>, vector<1x1x8x256xbf16>,
    %23 = arith.mulf %5, %14 : vector<8x256xf32>
    %c0_15 = arith.constant 0 : index
    %c1 = arith.constant 1 : index
    %c0_16 = arith.constant 0 : index
    %c0_17 = arith.constant 0 : index
    %24 = vector.load %arg3[%c0_15, %c1, %c0_16, %c0_17] : memref<1x8x8x256xf32, #tpu.memory_space<vmem>>, vector<1x1x8x256xf32>
    %25 = vector.shape_cast %24 : vector<1x1x8x256xf32> to vector<8x256xf32>
    %26 = arith.addf %23, %25 : vector<8x256xf32>
    %cst_18 = arith.constant 1.000000e+00 : f32
    %27 = vector.broadcast %cst_18 : f32 to vector<8x256xf32>
    %28 = arith.mulf %27, %18 : vector<8x256xf32>
    %29 = arith.subf %26, %28 : vector<8x256xf32>
    %cst_19 = arith.constant 1.000000e+00 : f32
    %30 = vector.broadcast %cst_19 : f32 to vector<8x256xf32>
    %31 = arith.cmpf oge, %29, %30 : vector<8x256xf32>
    %32 = arith.extui %31 : vector<8x256xi1> to vector<8x256xi32>
    %33 = arith.sitofp %32 : vector<8x256xi32> to vector<8x256xf32>
    %34 = arith.truncf %33 : vector<8x256xf32> to vector<8x256xbf16>
    %c0_20 = arith.constant 0 : index
    %c1_21 = arith.constant 1 : index
    %c0_22 = arith.constant 0 : index
    %c0_23 = arith.constant 0 : index
    %35 = vector.load %arg5[%c0_20, %c1_21, %c0_22, %c0_23] : memref<1x8x8x256xbf16, #tpu.memory_space<vmem>>, vector<1x1x8x256xbf16>
    %36 = vector.shape_cast %35 : vector<1x1x8x256xbf16> to vector<8x256xbf16>
    %37 = vector.shape_cast %34 : vector<8x256xbf16> to vector<1x1x8x256xbf16>
    tpu.vector_store %arg5[%c0_20, %c1_21, %c0_22, %c0_23], %37 {strides = array<i32>} : memref<1x8x8x256xbf16, #tpu.memory_space<vmem>>, vector<1x1x8x256xbf16>,
    %38 = arith.mulf %5, %29 : vector<8x256xf32>
    %c0_24 = arith.constant 0 : index
    %c2 = arith.constant 2 : index
    %c0_25 = arith.constant 0 : index
    %c0_26 = arith.constant 0 : index
    %39 = vector.load %arg3[%c0_24, %c2, %c0_25, %c0_26] : memref<1x8x8x256xf32, #tpu.memory_space<vmem>>, vector<1x1x8x256xf32>
    %40 = vector.shape_cast %39 : vector<1x1x8x256xf32> to vector<8x256xf32>
    %41 = arith.addf %38, %40 : vector<8x256xf32>
    %cst_27 = arith.constant 1.000000e+00 : f32
    %42 = vector.broadcast %cst_27 : f32 to vector<8x256xf32>
    %43 = arith.mulf %42, %33 : vector<8x256xf32>
    %44 = arith.subf %41, %43 : vector<8x256xf32>
    %cst_28 = arith.constant 1.000000e+00 : f32
    %45 = vector.broadcast %cst_28 : f32 to vector<8x256xf32>
    %46 = arith.cmpf oge, %44, %45 : vector<8x256xf32>
    %47 = arith.extui %46 : vector<8x256xi1> to vector<8x256xi32>
    %48 = arith.sitofp %47 : vector<8x256xi32> to vector<8x256xf32>
    %49 = arith.truncf %48 : vector<8x256xf32> to vector<8x256xbf16>
    %c0_29 = arith.constant 0 : index
    %c2_30 = arith.constant 2 : index
    %c0_31 = arith.constant 0 : index
    %c0_32 = arith.constant 0 : index
    %50 = vector.load %arg5[%c0_29, %c2_30, %c0_31, %c0_32] : memref<1x8x8x256xbf16, #tpu.memory_space<vmem>>, vector<1x1x8x256xbf16>
    %51 = vector.shape_cast %50 : vector<1x1x8x256xbf16> to vector<8x256xbf16>
    %52 = vector.shape_cast %49 : vector<8x256xbf16> to vector<1x1x8x256xbf16>
    tpu.vector_store %arg5[%c0_29, %c2_30, %c0_31, %c0_32], %52 {strides = array<i32>} : memref<1x8x8x256xbf16, #tpu.memory_space<vmem>>, vector<1x1x8x256xbf16>,
    %53 = arith.mulf %5, %44 : vector<8x256xf32>
    %c0_33 = arith.constant 0 : index
    %c3 = arith.constant 3 : index
    %c0_34 = arith.constant 0 : index
    %c0_35 = arith.constant 0 : index
    %54 = vector.load %arg3[%c0_33, %c3, %c0_34, %c0_35] : memref<1x8x8x256xf32, #tpu.memory_space<vmem>>, vector<1x1x8x256xf32>
    %55 = vector.shape_cast %54 : vector<1x1x8x256xf32> to vector<8x256xf32>
    %56 = arith.addf %53, %55 : vector<8x256xf32>
    %cst_36 = arith.constant 1.000000e+00 : f32
    %57 = vector.broadcast %cst_36 : f32 to vector<8x256xf32>
    %58 = arith.mulf %57, %48 : vector<8x256xf32>
    %59 = arith.subf %56, %58 : vector<8x256xf32>
    %cst_37 = arith.constant 1.000000e+00 : f32
    %60 = vector.broadcast %cst_37 : f32 to vector<8x256xf32>
    %61 = arith.cmpf oge, %59, %60 : vector<8x256xf32>
    %62 = arith.extui %61 : vector<8x256xi1> to vector<8x256xi32>
    %63 = arith.sitofp %62 : vector<8x256xi32> to vector<8x256xf32>
    %64 = arith.truncf %63 : vector<8x256xf32> to vector<8x256xbf16>
    %c0_38 = arith.constant 0 : index
    %c3_39 = arith.constant 3 : index
    %c0_40 = arith.constant 0 : index
    %c0_41 = arith.constant 0 : index
    %65 = vector.load %arg5[%c0_38, %c3_39, %c0_40, %c0_41] : memref<1x8x8x256xbf16, #tpu.memory_space<vmem>>, vector<1x1x8x256xbf16>
    %66 = vector.shape_cast %65 : vector<1x1x8x256xbf16> to vector<8x256xbf16>
    %67 = vector.shape_cast %64 : vector<8x256xbf16> to vector<1x1x8x256xbf16>
    tpu.vector_store %arg5[%c0_38, %c3_39, %c0_40, %c0_41], %67 {strides = array<i32>} : memref<1x8x8x256xbf16, #tpu.memory_space<vmem>>, vector<1x1x8x256xbf16>,
    %68 = arith.mulf %5, %59 : vector<8x256xf32>
    %c0_42 = arith.constant 0 : index
    %c4 = arith.constant 4 : index
    %c0_43 = arith.constant 0 : index
    %c0_44 = arith.constant 0 : index
    %69 = vector.load %arg3[%c0_42, %c4, %c0_43, %c0_44] : memref<1x8x8x256xf32, #tpu.memory_space<vmem>>, vector<1x1x8x256xf32>
    %70 = vector.shape_cast %69 : vector<1x1x8x256xf32> to vector<8x256xf32>
    %71 = arith.addf %68, %70 : vector<8x256xf32>
    %cst_45 = arith.constant 1.000000e+00 : f32
    %72 = vector.broadcast %cst_45 : f32 to vector<8x256xf32>
    %73 = arith.mulf %72, %63 : vector<8x256xf32>
    %74 = arith.subf %71, %73 : vector<8x256xf32>
    %cst_46 = arith.constant 1.000000e+00 : f32
    %75 = vector.broadcast %cst_46 : f32 to vector<8x256xf32>
    %76 = arith.cmpf oge, %74, %75 : vector<8x256xf32>
    %77 = arith.extui %76 : vector<8x256xi1> to vector<8x256xi32>
    %78 = arith.sitofp %77 : vector<8x256xi32> to vector<8x256xf32>
    %79 = arith.truncf %78 : vector<8x256xf32> to vector<8x256xbf16>
    %c0_47 = arith.constant 0 : index
    %c4_48 = arith.constant 4 : index
    %c0_49 = arith.constant 0 : index
    %c0_50 = arith.constant 0 : index
    %80 = vector.load %arg5[%c0_47, %c4_48, %c0_49, %c0_50] : memref<1x8x8x256xbf16, #tpu.memory_space<vmem>>, vector<1x1x8x256xbf16>
    %81 = vector.shape_cast %80 : vector<1x1x8x256xbf16> to vector<8x256xbf16>
    %82 = vector.shape_cast %79 : vector<8x256xbf16> to vector<1x1x8x256xbf16>
    tpu.vector_store %arg5[%c0_47, %c4_48, %c0_49, %c0_50], %82 {strides = array<i32>} : memref<1x8x8x256xbf16, #tpu.memory_space<vmem>>, vector<1x1x8x256xbf16>,
    %83 = arith.mulf %5, %74 : vector<8x256xf32>
    %c0_51 = arith.constant 0 : index
    %c5 = arith.constant 5 : index
    %c0_52 = arith.constant 0 : index
    %c0_53 = arith.constant 0 : index
    %84 = vector.load %arg3[%c0_51, %c5, %c0_52, %c0_53] : memref<1x8x8x256xf32, #tpu.memory_space<vmem>>, vector<1x1x8x256xf32>
    %85 = vector.shape_cast %84 : vector<1x1x8x256xf32> to vector<8x256xf32>
    %86 = arith.addf %83, %85 : vector<8x256xf32>
    %cst_54 = arith.constant 1.000000e+00 : f32
    %87 = vector.broadcast %cst_54 : f32 to vector<8x256xf32>
    %88 = arith.mulf %87, %78 : vector<8x256xf32>
    %89 = arith.subf %86, %88 : vector<8x256xf32>
    %cst_55 = arith.constant 1.000000e+00 : f32
    %90 = vector.broadcast %cst_55 : f32 to vector<8x256xf32>
    %91 = arith.cmpf oge, %89, %90 : vector<8x256xf32>
    %92 = arith.extui %91 : vector<8x256xi1> to vector<8x256xi32>
    %93 = arith.sitofp %92 : vector<8x256xi32> to vector<8x256xf32>
    %94 = arith.truncf %93 : vector<8x256xf32> to vector<8x256xbf16>
    %c0_56 = arith.constant 0 : index
    %c5_57 = arith.constant 5 : index
    %c0_58 = arith.constant 0 : index
    %c0_59 = arith.constant 0 : index
    %95 = vector.load %arg5[%c0_56, %c5_57, %c0_58, %c0_59] : memref<1x8x8x256xbf16, #tpu.memory_space<vmem>>, vector<1x1x8x256xbf16>
    %96 = vector.shape_cast %95 : vector<1x1x8x256xbf16> to vector<8x256xbf16>
    %97 = vector.shape_cast %94 : vector<8x256xbf16> to vector<1x1x8x256xbf16>
    tpu.vector_store %arg5[%c0_56, %c5_57, %c0_58, %c0_59], %97 {strides = array<i32>} : memref<1x8x8x256xbf16, #tpu.memory_space<vmem>>, vector<1x1x8x256xbf16>,
    %98 = arith.mulf %5, %89 : vector<8x256xf32>
    %c0_60 = arith.constant 0 : index
    %c6 = arith.constant 6 : index
    %c0_61 = arith.constant 0 : index
    %c0_62 = arith.constant 0 : index
    %99 = vector.load %arg3[%c0_60, %c6, %c0_61, %c0_62] : memref<1x8x8x256xf32, #tpu.memory_space<vmem>>, vector<1x1x8x256xf32>
    %100 = vector.shape_cast %99 : vector<1x1x8x256xf32> to vector<8x256xf32>
    %101 = arith.addf %98, %100 : vector<8x256xf32>
    %cst_63 = arith.constant 1.000000e+00 : f32
    %102 = vector.broadcast %cst_63 : f32 to vector<8x256xf32>
    %103 = arith.mulf %102, %93 : vector<8x256xf32>
    %104 = arith.subf %101, %103 : vector<8x256xf32>
    %cst_64 = arith.constant 1.000000e+00 : f32
    %105 = vector.broadcast %cst_64 : f32 to vector<8x256xf32>
    %106 = arith.cmpf oge, %104, %105 : vector<8x256xf32>
    %107 = arith.extui %106 : vector<8x256xi1> to vector<8x256xi32>
    %108 = arith.sitofp %107 : vector<8x256xi32> to vector<8x256xf32>
    %109 = arith.truncf %108 : vector<8x256xf32> to vector<8x256xbf16>
    %c0_65 = arith.constant 0 : index
    %c6_66 = arith.constant 6 : index
    %c0_67 = arith.constant 0 : index
    %c0_68 = arith.constant 0 : index
    %110 = vector.load %arg5[%c0_65, %c6_66, %c0_67, %c0_68] : memref<1x8x8x256xbf16, #tpu.memory_space<vmem>>, vector<1x1x8x256xbf16>
    %111 = vector.shape_cast %110 : vector<1x1x8x256xbf16> to vector<8x256xbf16>
    %112 = vector.shape_cast %109 : vector<8x256xbf16> to vector<1x1x8x256xbf16>
    tpu.vector_store %arg5[%c0_65, %c6_66, %c0_67, %c0_68], %112 {strides = array<i32>} : memref<1x8x8x256xbf16, #tpu.memory_space<vmem>>, vector<1x1x8x256xbf16>,
    %113 = arith.mulf %5, %104 : vector<8x256xf32>
    %c0_69 = arith.constant 0 : index
    %c7 = arith.constant 7 : index
    %c0_70 = arith.constant 0 : index
    %c0_71 = arith.constant 0 : index
    %114 = vector.load %arg3[%c0_69, %c7, %c0_70, %c0_71] : memref<1x8x8x256xf32, #tpu.memory_space<vmem>>, vector<1x1x8x256xf32>
    %115 = vector.shape_cast %114 : vector<1x1x8x256xf32> to vector<8x256xf32>
    %116 = arith.addf %113, %115 : vector<8x256xf32>
    %cst_72 = arith.constant 1.000000e+00 : f32
    %117 = vector.broadcast %cst_72 : f32 to vector<8x256xf32>
    %118 = arith.mulf %117, %108 : vector<8x256xf32>
    %119 = arith.subf %116, %118 : vector<8x256xf32>
    %cst_73 = arith.constant 1.000000e+00 : f32
    %120 = vector.broadcast %cst_73 : f32 to vector<8x256xf32>
    %121 = arith.cmpf oge, %119, %120 : vector<8x256xf32>
    %122 = arith.extui %121 : vector<8x256xi1> to vector<8x256xi32>
    %123 = arith.sitofp %122 : vector<8x256xi32> to vector<8x256xf32>
    %124 = arith.truncf %123 : vector<8x256xf32> to vector<8x256xbf16>
    %c0_74 = arith.constant 0 : index
    %c7_75 = arith.constant 7 : index
    %c0_76 = arith.constant 0 : index
    %c0_77 = arith.constant 0 : index
    %125 = vector.load %arg5[%c0_74, %c7_75, %c0_76, %c0_77] : memref<1x8x8x256xbf16, #tpu.memory_space<vmem>>, vector<1x1x8x256xbf16>
    %126 = vector.shape_cast %125 : vector<1x1x8x256xbf16> to vector<8x256xbf16>
    %127 = vector.shape_cast %124 : vector<8x256xbf16> to vector<1x1x8x256xbf16>
    tpu.vector_store %arg5[%c0_74, %c7_75, %c0_76, %c0_77], %127 {strides = array<i32>} : memref<1x8x8x256xbf16, #tpu.memory_space<vmem>>, vector<1x1x8x256xbf16>,
    %c0_78 = arith.constant 0 : index
    %c0_79 = arith.constant 0 : index
    %128 = vector.load %arg6[%c0_78, %c0_79] : memref<8x256xf32, #tpu.memory_space<vmem>>, vector<8x256xf32>
    tpu.vector_store %arg6[%c0_78, %c0_79], %119 {strides = array<i32>} : memref<8x256xf32, #tpu.memory_space<vmem>>, vector<8x256xf32>,
    %c0_80 = arith.constant 0 : index
    %c0_81 = arith.constant 0 : index
    %129 = vector.load %arg7[%c0_80, %c0_81] : memref<8x256xf32, #tpu.memory_space<vmem>>, vector<8x256xf32>
    tpu.vector_store %arg7[%c0_80, %c0_81], %123 {strides = array<i32>} : memref<8x256xf32, #tpu.memory_space<vmem>>, vector<8x256xf32>,
    return
  }
  func.func @transform_0(%arg0: i32, %arg1: i32, %arg2: i32) -> (i32, i32, i32, i32) {
    %c0_i32 = arith.constant 0 : i32
    %c0_i32_0 = arith.constant 0 : i32
    return %arg0, %arg2, %arg1, %c0_i32 : i32, i32, i32, i32
  }
  func.func @transform_1(%arg0: i32, %arg1: i32, %arg2: i32) -> (i32, i32) {
    %c0_i32 = arith.constant 0 : i32
    %c0_i32_0 = arith.constant 0 : i32
    return %arg1, %c0_i32 : i32, i32
  }
  func.func @transform_2(%arg0: i32, %arg1: i32, %arg2: i32) -> (i32, i32, i32, i32) {
    %c0_i32 = arith.constant 0 : i32
    %c0_i32_0 = arith.constant 0 : i32
    return %arg0, %arg2, %arg1, %c0_i32 : i32, i32, i32, i32
  }
}

</mosaic_0001>

<llo_original>
// kernel: scnn_layer_pallas.1
$region0: #{scnn_layer_pallas.1}
  #allocation0 [shape = 'u32[]', space=smem, size = 0x4, offset = 0x4, fixed_abs, tag = 'smem constant byte address 0x4 - core index']
  #allocation1 [shape = 'u32[72,128]{1,0:T(1,128)}', space=vmem, size = 0x9000, scoped, tag = 'internal scratch']
  #allocation2 [shape = 'f32[8,256]{1,0:T(8,128)}', space=vmem, size = 0x2000, scoped, tag = 'scratch operand']
  #allocation3 [shape = 'f32[8,256]{1,0:T(8,128)}', space=vmem, size = 0x2000, scoped, tag = 'scratch operand']
  %s0 = inlined_call_operand.vmem [shape: f32[2,8,8,256], index: 0, kind: input, shape index: {}]
  %s1 = inlined_call_operand.vmem [shape: f32[8,1], index: 1, kind: input, shape index: {}]
  %s2 = inlined_call_operand.vmem [shape: bf16[2,8,8,256], index: 2, kind: output, shape index: {}]
  %s3 = sld [smem:[#allocation0]]
  $region45: #{scnn_layer_pallas.1} parent=0
    _
  %s5 = ssub.s32 1, %s3
  %s6 = scalar_select 0, %s5, %s3
  loop: start=0, step=1, limit=4
  $region2: #{scnn_layer_pallas.1} parent=0 // loop_pre_header
    _
  $region3: #{scnn_layer_pallas.1} parent=0 // loop_header
    %s8 = sphi 0, %s12
    %p9 = scmp.ge.s32.totalorder %s8, 4
    %s15 = sphi 0, %s34
    %s16 = sphi 0, %s30
    %s17 = sphi 0, %s26
    %s18 = sphi 0, %s15
    %s19 = sphi 0, %s16
    %s20 = sphi 0, %s17
    %s21 = sphi 0, %s18
    %s22 = sphi 0, %s19
    %s23 = sphi 0, %s20
    %s41 = sphi 0, %s43
    %s44 = sphi 0, %s41
    %s45 = sphi 0, %s44
    %s61 = sphi 0, %s45
    %s67 = sphi 0, %s69
    %s70 = sphi 0, %s67
    %s71 = sphi 0, %s70
    %s87 = sphi 0, %s71
    %s97 = sphi 0, %s99
    %s100 = sphi 0, %s97
    %s101 = sphi 0, %s100
    %s117 = sphi 0, %s101
  $region4: #{scnn_layer_pallas.1} parent=0 // loop_header_branch
    %11 = sbr.rel (%p9) target = $region8
  $region5: #{scnn_layer_pallas.1} parent=0 // loop_body
    %s13 = ssub.s32 %s8, 1
    %s14 = ssub.s32 %s8, 2
    %s24 = sadd.s32 1, %s17
    %p25 = scmp.ge.s32.totalorder %s24, 1
    %s26 = scalar_select %p25, 0, %s24
    %s27 = sadd.s32 1, %s16
    %s28 = scalar_select %p25, %s27, %s16
    %p29 = scmp.ge.s32.totalorder %s28, 1
    %s30 = scalar_select %p29, 0, %s28
    %s31 = sadd.s32 1, %s15
    %s32 = scalar_select %p29, %s31, %s15
    %p33 = scmp.ge.s32.totalorder %s32, 2
    %s34 = scalar_select %p33, 0, %s32
    %s35 = ssub.s32 %s15, %s34
    %s36 = ssub.s32 %s17, %s26
    %s37 = sor.u32 %s35, %s36
    %s38 = ssub.s32 %s16, %s30
    %s39 = sor.u32 %s37, %s38
    %p40 = scmp.eq.s32.totalorder %s39, 0
    %s42 = sadd.s32 %s41, 1
    %s43 = scalar_select %p40, %s41, %s42
    %p46 = pneg %p40
    %p47 = scmp.eq.s32.totalorder %s8, 1
    %p48 = por %p46, %p47
    %p49 = scmp.ne.s32.totalorder %s41, %s44
    %p50 = scmp.eq.s32.totalorder %s8, 0
    %p51 = por %p49, %p50
    %p52 = scmp.ne.s32.totalorder %s41, %s44
    %p53 = scmp.eq.s32.totalorder %s13, 1
    %p54 = por %p52, %p53
    %p55 = scmp.ne.s32.totalorder %s44, %s45
    %p56 = scmp.eq.s32.totalorder %s13, 0
    %p57 = por %p55, %p56
    %p58 = scmp.ne.s32.totalorder %s44, %s45
    %p59 = scmp.eq.s32.totalorder %s14, 1
    %p60 = por %p58, %p59
    %p62 = scmp.ne.s32.totalorder %s45, %s61
    %p63 = scmp.eq.s32.totalorder %s14, 0
    %p64 = por %p62, %p63
    %s65 = ssub.s32 %s16, %s30
    %p66 = scmp.eq.s32.totalorder %s65, 0
    %s68 = sadd.s32 %s67, 1
    %s69 = scalar_select %p66, %s67, %s68
    %p72 = pneg %p66
    %p73 = scmp.eq.s32.totalorder %s8, 1
    %p74 = por %p72, %p73
    %p75 = scmp.ne.s32.totalorder %s67, %s70
    %p76 = scmp.eq.s32.totalorder %s8, 0
    %p77 = por %p75, %p76
    %p78 = scmp.ne.s32.totalorder %s67, %s70
    %p79 = scmp.eq.s32.totalorder %s13, 1
    %p80 = por %p78, %p79
    %p81 = scmp.ne.s32.totalorder %s70, %s71
    %p82 = scmp.eq.s32.totalorder %s13, 0
    %p83 = por %p81, %p82
    %p84 = scmp.ne.s32.totalorder %s70, %s71
    %p85 = scmp.eq.s32.totalorder %s14, 1
    %p86 = por %p84, %p85
    %p88 = scmp.ne.s32.totalorder %s71, %s87
    %p89 = scmp.eq.s32.totalorder %s14, 0
    %p90 = por %p88, %p89
    %s91 = ssub.s32 %s15, %s34
    %s92 = ssub.s32 %s17, %s26
    %s93 = sor.u32 %s91, %s92
    %s94 = ssub.s32 %s16, %s30
    %s95 = sor.u32 %s93, %s94
    %p96 = scmp.eq.s32.totalorder %s95, 0
    %s98 = sadd.s32 %s97, 1
    %s99 = scalar_select %p96, %s97, %s98
    %p102 = pneg %p96
    %p103 = scmp.eq.s32.totalorder %s8, 1
    %p104 = por %p102, %p103
    %p105 = scmp.ne.s32.totalorder %s97, %s100
    %p106 = scmp.eq.s32.totalorder %s8, 0
    %p107 = por %p105, %p106
    %p108 = scmp.ne.s32.totalorder %s97, %s100
    %p109 = scmp.eq.s32.totalorder %s13, 1
    %p110 = por %p108, %p109
    %p111 = scmp.ne.s32.totalorder %s100, %s101
    %p112 = scmp.eq.s32.totalorder %s13, 0
    %p113 = por %p111, %p112
    %p114 = scmp.ne.s32.totalorder %s100, %s101
    %p115 = scmp.eq.s32.totalorder %s14, 1
    %p116 = por %p114, %p115
    %p118 = scmp.ne.s32.totalorder %s101, %s117
    %p119 = scmp.eq.s32.totalorder %s14, 0
    %p120 = por %p118, %p119
    %p121 = scmp.le.s32.totalorder 1, %s8
    %p122 = scmp.lt.s32.totalorder %s8, 3
    %p123 = pnand %p121, %p122
    %p124 = pneg %p123
    // Predicated region
    $region9: #{scnn_layer_pallas.1} parent=5 // pred_check
      _
    $region10: #{scnn_layer_pallas.1} parent=5 // pred_check_branch
      %126 = sbr.rel (%p123) target = $region12
    $region11: #{scnn_layer_pallas.1} parent=5 // pred_region
      %s127 = ssub.s32 %s8, 1
      // Predicated region
      $region13: #{scnn_layer_pallas.1} parent=11 // pred_check
        %p128 = pneg %p83
      $region14: #{scnn_layer_pallas.1} parent=11 // pred_check_branch
        %130 = sbr.rel (%p128) target = $region16
      $region15: #{scnn_layer_pallas.1} parent=11 // pred_region
        %p131 = scmp.lt.s32.totalorder %s19, 0
        %s132 = scalar_select %p131, %s19, 0
        %s133 = smul.addr %s132, 8
        %s134 = scalar_lea.vmem %s1, %s133
      $region16: #{scnn_layer_pallas.1} parent=11 // pred_fallthru
        _
    $region12: #{scnn_layer_pallas.1} parent=5 // pred_fallthru
      _
    %p135 = scmp.lt.s32.totalorder %s8, 2
    // Predicated region
    $region17: #{scnn_layer_pallas.1} parent=5 // pred_check
      %p136 = pneg %p135
    $region18: #{scnn_layer_pallas.1} parent=5 // pred_check_branch
      %138 = sbr.rel (%p136) target = $region20
    $region19: #{scnn_layer_pallas.1} parent=5 // pred_region
      // Predicated region
      $region21: #{scnn_layer_pallas.1} parent=19 // pred_check
        %p139 = pneg %p51
      $region22: #{scnn_layer_pallas.1} parent=19 // pred_check_branch
        %141 = sbr.rel (%p139) target = $region24
      $region23: #{scnn_layer_pallas.1} parent=19 // pred_region
        %s142 = smul.u32 8, %s17
        %p143 = scmp.lt.s32.totalorder %s15, 1
        %s144 = scalar_select %p143, %s15, 1
        %p145 = scmp.lt.s32.totalorder %s142, 7
        %s146 = scalar_select %p145, %s142, 7
        %p147 = scmp.lt.s32.totalorder %s16, 0
        %s148 = scalar_select %p147, %s16, 0
        %s149 = smul.addr %s148, 2
        %s150 = smul.addr %s146, 2
        %s151 = sadd.s32 %s149, %s150
        %s152 = smul.addr %s144, 16
        %s153 = sadd.s32 %s151, %s152
        %s154 = smul.addr %s153, 8
        %s155 = scalar_lea.vmem %s0, %s154
        %s156 = smul.u32 8, %s17
      $region24: #{scnn_layer_pallas.1} parent=19 // pred_fallthru
        _
    $region20: #{scnn_layer_pallas.1} parent=5 // pred_fallthru
      _
    %p157 = scmp.le.s32.totalorder 1, %s8
    %p158 = scmp.lt.s32.totalorder %s8, 3
    %p159 = pnand %p157, %p158
    %p160 = pneg %p159
    // Predicated region
    $region25: #{scnn_layer_pallas.1} parent=5 // pred_check
      _
    $region26: #{scnn_layer_pallas.1} parent=5 // pred_check_branch
      %162 = sbr.rel (%p159) target = $region28
    $region27: #{scnn_layer_pallas.1} parent=5 // pred_region
      %s163 = ssub.s32 %s8, 1
      %s164 = smul.u32 8, %s20
      %p165 = scmp.lt.s32.totalorder %s18, 1
      %s166 = scalar_select %p165, %s18, 1
      %p167 = scmp.lt.s32.totalorder %s164, 7
      %s168 = scalar_select %p167, %s164, 7
      %p169 = scmp.lt.s32.totalorder %s19, 0
      %s170 = scalar_select %p169, %s19, 0
      %s171 = smul.addr %s170, 2
      %s172 = smul.addr %s168, 2
      %s173 = sadd.s32 %s171, %s172
      %s174 = smul.addr %s166, 16
      %s175 = sadd.s32 %s173, %s174
      %s176 = smul.addr %s175, 8
      %s177 = scalar_lea.vmem %s0, %s176
      %p178 = pneg %p57
      %p179 = pneg %p54
      %p180 = scmp.lt.s32.totalorder %s19, 0
      %s181 = scalar_select %p180, %s19, 0
      %s182 = smul.addr %s181, 8
      %s183 = scalar_lea.vmem %s1, %s182
      %p184 = pneg %p83
      %p185 = pneg %p80
      %p186 = pneg %p113
      %p187 = pneg %p110
      %s188 = smul.u32 8, %s20
      %p189 = scmp.lt.s32.totalorder %s18, 1
      %s190 = scalar_select %p189, %s18, 1
      %p191 = scmp.lt.s32.totalorder %s188, 7
      %s192 = scalar_select %p191, %s188, 7
      %p193 = scmp.lt.s32.totalorder %s19, 0
      %s194 = scalar_select %p193, %s19, 0
      %s195 = smul.addr %s194, 2
      %s196 = smul.addr %s192, 2
      %s197 = sadd.s32 %s195, %s196
      %s198 = smul.addr %s190, 16
      %s199 = sadd.s32 %s197, %s198
      %s200 = smul.addr %s199, 4
      %s201 = scalar_lea.vmem %s2, %s200
      %s202 = smul.u32 8, %s20
      %p203 = scmp.lt.s32.totalorder %s18, 1
      %s204 = scalar_select %p203, %s18, 1
      %p205 = scmp.lt.s32.totalorder %s202, 7
      %s206 = scalar_select %p205, %s202, 7
      %p207 = scmp.lt.s32.totalorder %s19, 0
      %s208 = scalar_select %p207, %s19, 0
      %s209 = smul.addr %s208, 2
      %s210 = smul.addr %s206, 2
      %s211 = sadd.s32 %s209, %s210
      %s212 = smul.addr %s204, 16
      %s213 = sadd.s32 %s211, %s212
      %s214 = smul.addr %s213, 8
      %s215 = scalar_lea.vmem %s0, %s214
      %s216 = smul.u32 8, %s20
      %p217 = scmp.lt.s32.totalorder %s19, 0
      %s218 = scalar_select %p217, %s19, 0
      %s219 = smul.addr %s218, 8
      %s220 = scalar_lea.vmem %s1, %s219
      %s221 = smul.u32 8, %s20
      %p222 = scmp.lt.s32.totalorder %s18, 1
      %s223 = scalar_select %p222, %s18, 1
      %p224 = scmp.lt.s32.totalorder %s221, 7
      %s225 = scalar_select %p224, %s221, 7
      %p226 = scmp.lt.s32.totalorder %s19, 0
      %s227 = scalar_select %p226, %s19, 0
      %s228 = smul.addr %s227, 2
      %s229 = smul.addr %s225, 2
      %s230 = sadd.s32 %s228, %s229
      %s231 = smul.addr %s223, 16
      %s232 = sadd.s32 %s230, %s231
      %s233 = smul.addr %s232, 4
      %s234 = scalar_lea.vmem %s2, %s233
      %s235 = smul.u32 8, %s20
      %p236 = scmp.eq.s32.totalorder %s20, 0
      // Predicated region
      $region29: #{scnn_layer_pallas.1} parent=27 // pred_check
        %p237 = pneg %p236
      $region30: #{scnn_layer_pallas.1} parent=27 // pred_check_branch
        %239 = sbr.rel (%p237) target = $region32
      $region31: #{scnn_layer_pallas.1} parent=27 // pred_region
        %240 = vst [vmem:[#allocation2] sm:$0xff] 0.0
        %241 = vst [vmem:[#allocation2 + $0x8] sm:$0xff] 0.0
        %242 = vst [vmem:[#allocation3] sm:$0xff] 0.0
        %243 = vst [vmem:[#allocation3 + $0x8] sm:$0xff] 0.0
      $region32: #{scnn_layer_pallas.1} parent=27 // pred_fallthru
        _
      %v244 = vld [vmem:[%s220] sm:$0xff]
      %246 = vset.pattern.permute.xlu0 0
      %247 = vperm.xlu0 %246, %v244
      %v248 = vpop.permute.xlu0 %247
      %v250 = vld [vmem:[#allocation2] sm:$0xff]
      %v251 = vld [vmem:[#allocation2 + $0x8] sm:$0xff]
      %v252 = vld [vmem:[#allocation3] sm:$0xff]
      %v253 = vld [vmem:[#allocation3 + $0x8] sm:$0xff]
      %v254 = vmul.f32 %v248, %v250
      %v255 = vmul.f32 %v248, %v251
      %v256 = vld [vmem:[%s215] sm:$0xff]
      %v257 = vld [vmem:[%s215 + $0x8] sm:$0xff]
      %v258 = vadd.f32 %v254, %v256
      %v259 = vadd.f32 %v255, %v257
      %v260 = vsub.f32 %v258, %v252
      %v261 = vsub.f32 %v259, %v253
      %vm262 = vcmp.ge.f32.partialorder %v260, 1.0
      %vm263 = vcmp.ge.f32.partialorder %v261, 1.0
      %v264 = vsel %vm262, 1, 0
      %v265 = vsel %vm263, 1, 0
      %v266 = vcvt.s32.f32 %v264
      %v267 = vcvt.s32.f32 %v265
      %v268 = vpack.c.bf16 %v267, %v266
      %269 = vst [vmem:[%s234] sm:$0xff] %v268
      %v270 = vmul.f32 %v248, %v260
      %v271 = vmul.f32 %v248, %v261
      %s272 = scalar_lea.vmem %s215, 16
      %v273 = vld [vmem:[%s272] sm:$0xff]
      %v274 = vld [vmem:[%s272 + $0x8] sm:$0xff]
      %v275 = vadd.f32 %v270, %v273
      %v276 = vadd.f32 %v271, %v274
      %v277 = vsub.f32 %v275, %v266
      %v278 = vsub.f32 %v276, %v267
      %vm279 = vcmp.ge.f32.partialorder %v277, 1.0
      %vm280 = vcmp.ge.f32.partialorder %v278, 1.0
      %v281 = vsel %vm279, 1, 0
      %v282 = vsel %vm280, 1, 0
      %v283 = vcvt.s32.f32 %v281
      %v284 = vcvt.s32.f32 %v282
      %v285 = vpack.c.bf16 %v284, %v283
      %s286 = scalar_lea.vmem %s234, 8
      %287 = vst [vmem:[%s286] sm:$0xff] %v285
      %v288 = vmul.f32 %v248, %v277
      %v289 = vmul.f32 %v248, %v278
      %s290 = scalar_lea.vmem %s215, 32
      %v291 = vld [vmem:[%s290] sm:$0xff]
      %v292 = vld [vmem:[%s290 + $0x8] sm:$0xff]
      %v293 = vadd.f32 %v288, %v291
      %v294 = vadd.f32 %v289, %v292
      %v295 = vsub.f32 %v293, %v283
      %v296 = vsub.f32 %v294, %v284
      %vm297 = vcmp.ge.f32.partialorder %v295, 1.0
      %vm298 = vcmp.ge.f32.partialorder %v296, 1.0
      %v299 = vsel %vm297, 1, 0
      %v300 = vsel %vm298, 1, 0
      %v301 = vcvt.s32.f32 %v299
      %v302 = vcvt.s32.f32 %v300
      %v303 = vpack.c.bf16 %v302, %v301
      %s304 = scalar_lea.vmem %s234, 16
      %305 = vst [vmem:[%s304] sm:$0xff] %v303
      %v306 = vmul.f32 %v248, %v295
      %v307 = vmul.f32 %v248, %v296
      %s308 = scalar_lea.vmem %s215, 48
      %v309 = vld [vmem:[%s308] sm:$0xff]
      %v310 = vld [vmem:[%s308 + $0x8] sm:$0xff]
      %v311 = vadd.f32 %v306, %v309
      %v312 = vadd.f32 %v307, %v310
      %v313 = vsub.f32 %v311, %v301
      %v314 = vsub.f32 %v312, %v302
      %vm315 = vcmp.ge.f32.partialorder %v313, 1.0
      %vm316 = vcmp.ge.f32.partialorder %v314, 1.0
      %v317 = vsel %vm315, 1, 0
      %v318 = vsel %vm316, 1, 0
      %v319 = vcvt.s32.f32 %v317
      %v320 = vcvt.s32.f32 %v318
      %v321 = vpack.c.bf16 %v320, %v319
      %s322 = scalar_lea.vmem %s234, 24
      %323 = vst [vmem:[%s322] sm:$0xff] %v321
      %v324 = vmul.f32 %v248, %v313
      %v325 = vmul.f32 %v248, %v314
      %s326 = scalar_lea.vmem %s215, 64
      %v327 = vld [vmem:[%s326] sm:$0xff]
      %v328 = vld [vmem:[%s326 + $0x8] sm:$0xff]
      %v329 = vadd.f32 %v324, %v327
      %v330 = vadd.f32 %v325, %v328
      %v331 = vsub.f32 %v329, %v319
      %v332 = vsub.f32 %v330, %v320
      %vm333 = vcmp.ge.f32.partialorder %v331, 1.0
      %vm334 = vcmp.ge.f32.partialorder %v332, 1.0
      %v335 = vsel %vm333, 1, 0
      %v336 = vsel %vm334, 1, 0
      %v337 = vcvt.s32.f32 %v335
      %v338 = vcvt.s32.f32 %v336
      %v339 = vpack.c.bf16 %v338, %v337
      %s340 = scalar_lea.vmem %s234, 32
      %341 = vst [vmem:[%s340] sm:$0xff] %v339
      %v342 = vmul.f32 %v248, %v331
      %v343 = vmul.f32 %v248, %v332
      %s344 = scalar_lea.vmem %s215, 80
      %v345 = vld [vmem:[%s344] sm:$0xff]
      %v346 = vld [vmem:[%s344 + $0x8] sm:$0xff]
      %v347 = vadd.f32 %v342, %v345
      %v348 = vadd.f32 %v343, %v346
      %v349 = vsub.f32 %v347, %v337
      %v350 = vsub.f32 %v348, %v338
      %vm351 = vcmp.ge.f32.partialorder %v349, 1.0
      %vm352 = vcmp.ge.f32.partialorder %v350, 1.0
      %v353 = vsel %vm351, 1, 0
      %v354 = vsel %vm352, 1, 0
      %v355 = vcvt.s32.f32 %v353
      %v356 = vcvt.s32.f32 %v354
      %v357 = vpack.c.bf16 %v356, %v355
      %s358 = scalar_lea.vmem %s234, 40
      %359 = vst [vmem:[%s358] sm:$0xff] %v357
      %v360 = vmul.f32 %v248, %v349
      %v361 = vmul.f32 %v248, %v350
      %s362 = scalar_lea.vmem %s215, 96
      %v363 = vld [vmem:[%s362] sm:$0xff]
      %v364 = vld [vmem:[%s362 + $0x8] sm:$0xff]
      %v365 = vadd.f32 %v360, %v363
      %v366 = vadd.f32 %v361, %v364
      %v367 = vsub.f32 %v365, %v355
      %v368 = vsub.f32 %v366, %v356
      %vm369 = vcmp.ge.f32.partialorder %v367, 1.0
      %vm370 = vcmp.ge.f32.partialorder %v368, 1.0
      %v371 = vsel %vm369, 1, 0
      %v372 = vsel %vm370, 1, 0
      %v373 = vcvt.s32.f32 %v371
      %v374 = vcvt.s32.f32 %v372
      %v375 = vpack.c.bf16 %v374, %v373
      %s376 = scalar_lea.vmem %s234, 48
      %377 = vst [vmem:[%s376] sm:$0xff] %v375
      %v378 = vmul.f32 %v248, %v367
      %v379 = vmul.f32 %v248, %v368
      %s380 = scalar_lea.vmem %s215, 112
      %v381 = vld [vmem:[%s380] sm:$0xff]
      %v382 = vld [vmem:[%s380 + $0x8] sm:$0xff]
      %v383 = vadd.f32 %v378, %v381
      %v384 = vadd.f32 %v379, %v382
      %v385 = vsub.f32 %v383, %v373
      %v386 = vsub.f32 %v384, %v374
      %vm387 = vcmp.ge.f32.partialorder %v385, 1.0
      %vm388 = vcmp.ge.f32.partialorder %v386, 1.0
      %v389 = vsel %vm387, 1, 0
      %v390 = vsel %vm388, 1, 0
      %v391 = vcvt.s32.f32 %v389
      %v392 = vcvt.s32.f32 %v390
      %v393 = vpack.c.bf16 %v392, %v391
      %s394 = scalar_lea.vmem %s234, 56
      %395 = vst [vmem:[%s394] sm:$0xff] %v393
      %396 = vst [vmem:[#allocation2] sm:$0xff] %v385
      %397 = vst [vmem:[#allocation2 + $0x8] sm:$0xff] %v386
      %398 = vst [vmem:[#allocation3] sm:$0xff] %v391
      %399 = vst [vmem:[#allocation3 + $0x8] sm:$0xff] %v392
      %s400 = smul.u32 8, %s20
      %p401 = scmp.lt.s32.totalorder %s18, 1
      %s402 = scalar_select %p401, %s18, 1
      %p403 = scmp.lt.s32.totalorder %s400, 7
      %s404 = scalar_select %p403, %s400, 7
      %p405 = scmp.lt.s32.totalorder %s19, 0
      %s406 = scalar_select %p405, %s19, 0
      %s407 = smul.addr %s406, 2
      %s408 = smul.addr %s404, 2
      %s409 = sadd.s32 %s407, %s408
      %s410 = smul.addr %s402, 16
      %s411 = sadd.s32 %s409, %s410
      %s412 = smul.addr %s411, 4
      %s413 = scalar_lea.vmem %s2, %s412
      // Predicated region
      $region33: #{scnn_layer_pallas.1} parent=27 // pred_check
        %p414 = pneg %p110
      $region34: #{scnn_layer_pallas.1} parent=27 // pred_check_branch
        %416 = sbr.rel (%p414) target = $region36
      $region35: #{scnn_layer_pallas.1} parent=27 // pred_region
        %s417 = smul.u32 8, %s20
      $region36: #{scnn_layer_pallas.1} parent=27 // pred_fallthru
        _
    $region28: #{scnn_layer_pallas.1} parent=5 // pred_fallthru
      _
    %p418 = scmp.le.s32.totalorder 2, %s8
    // Predicated region
    $region37: #{scnn_layer_pallas.1} parent=5 // pred_check
      %p419 = pneg %p418
    $region38: #{scnn_layer_pallas.1} parent=5 // pred_check_branch
      %421 = sbr.rel (%p419) target = $region40
    $region39: #{scnn_layer_pallas.1} parent=5 // pred_region
      %s422 = ssub.s32 %s8, 2
      // Predicated region
      $region41: #{scnn_layer_pallas.1} parent=39 // pred_check
        %p423 = pneg %p116
      $region42: #{scnn_layer_pallas.1} parent=39 // pred_check_branch
        %425 = sbr.rel (%p423) target = $region44
      $region43: #{scnn_layer_pallas.1} parent=39 // pred_region
        %s426 = smul.u32 8, %s23
        %p427 = scmp.lt.s32.totalorder %s21, 1
        %s428 = scalar_select %p427, %s21, 1
        %p429 = scmp.lt.s32.totalorder %s426, 7
        %s430 = scalar_select %p429, %s426, 7
        %p431 = scmp.lt.s32.totalorder %s22, 0
        %s432 = scalar_select %p431, %s22, 0
        %s433 = smul.addr %s432, 2
        %s434 = smul.addr %s430, 2
        %s435 = sadd.s32 %s433, %s434
        %s436 = smul.addr %s428, 16
        %s437 = sadd.s32 %s435, %s436
        %s438 = smul.addr %s437, 4
        %s439 = scalar_lea.vmem %s2, %s438
      $region44: #{scnn_layer_pallas.1} parent=39 // pred_fallthru
        _
    $region40: #{scnn_layer_pallas.1} parent=5 // pred_fallthru
      _
  $region6: #{scnn_layer_pallas.1} parent=0 // loop_footer
    %s12 = sadd.s32 1, %s8
  $region7: #{scnn_layer_pallas.1} parent=0 // loop_footer_branch
    %7 = sbr.rel target = $region3
  $region8: #{scnn_layer_pallas.1} parent=0 // loop_exit
    _

</llo_original>
